<compile_context>
chip_gen: v5e
topology: v5e:2x2
jax: 0.10.0
libtpu: 0.0.40
codegen_flags: <defaults>
</compile_context>

<pallas_src>
import jax
import jax.numpy as jnp
from jax import lax
from jax.experimental import pallas as pl
from jax.experimental.pallas import tpu as pltpu

_MIB = 1024 * 1024


# --------------------------------------------------------------------------- #
# Kernels
# --------------------------------------------------------------------------- #
def _linear_kernel(x_ref, w_ref, b_ref, o_ref):
    # y = x @ W^T + b : MXU matmul with f32 accumulation; bias add on the VPU.
    acc = lax.dot_general(
        x_ref[...], w_ref[...],
        dimension_numbers=(((1,), (1,)), ((), ())),   # contract K of x with K of W[N, K]
        preferred_element_type=jnp.float32,
    )
    o_ref[...] = (acc + b_ref[...]).astype(o_ref.dtype)


def _linear_kernel_ktiled(x_ref, w_ref, b_ref, o_ref, acc_ref):
    # Same contraction, K streamed over the last ("arbitrary") grid axis.
    k = pl.program_id(1)

    @pl.when(k == 0)
    def _():
        acc_ref[...] = jnp.zeros_like(acc_ref)

    acc_ref[...] += lax.dot_general(
        x_ref[...], w_ref[...],
        dimension_numbers=(((1,), (1,)), ((), ())),
        preferred_element_type=jnp.float32,
    )

    @pl.when(k == pl.num_programs(1) - 1)
    def _():
        o_ref[...] = (acc_ref[...] + b_ref[...]).astype(o_ref.dtype)


# --------------------------------------------------------------------------- #
# Helpers
# --------------------------------------------------------------------------- #
def _round_up(x, m):
    return ((x + m - 1) // m) * m


def _vmem_capacity_bytes():
    """Physical per-core VMEM (128 MiB on v5e/v6e, 64 MiB on v7x)."""
    try:
        cap = int(pltpu.get_tpu_info().vmem_capacity_bytes)
        if cap > 0:
            return cap
    except Exception:
        pass
    return 64 * _MIB  # conservative (v7x-sized) default


def _resident_spec(block_shape, index_map, resident_mode):
    if resident_mode is None:
        return pl.BlockSpec(block_shape, index_map)
    return pl.BlockSpec(block_shape, index_map, pipeline_mode=resident_mode)


def _run_maybe_single_buffered(run_fn):
    """Try pl.Buffered(1) for grid-invariant operands; fall back cleanly."""
    buffered_cls = getattr(pl, "Buffered", None)
    if buffered_cls is not None:
        try:
            return run_fn(buffered_cls(buffer_count=1))
        except Exception:
            pass  # unsupported -> default double buffering (previous proven path)
    return run_fn(None)


def _pick_tm(budget_rows, b, row_align, cap_rows):
    """Row tile: budget/cap limited, aligned, >=2 tiles for v7x megacore."""
    tm = max(row_align, min(int(budget_rows), cap_rows))
    tm = (tm // row_align) * row_align
    if b <= row_align:
        return b                                    # single block == full dim (valid)
    tm = min(tm, (b // row_align) * row_align)      # aligned and <= b
    if b > 2 * row_align:
        # Ensure >=2 batch tiles so the "parallel" axis shards across 2 TCs on v7x.
        tm = min(tm, _round_up(pl.cdiv(b, 2), row_align))
    return max(tm, row_align)


# --------------------------------------------------------------------------- #
# Wrapper
# --------------------------------------------------------------------------- #
def linear_regression_forward(x, weight, bias):
    """y = reshape(x, (B, num_inputs)) @ weight.T + bias  (PyTorch nn.Linear semantics).

    x      : [B, ...]                   (trailing dims flatten to num_inputs)
    weight : [num_outputs, num_inputs]  (PyTorch layout, consumed untransposed)
    bias   : [num_outputs]
    returns: [B, num_outputs]
    """
    num_outputs, num_inputs = weight.shape
    b = x.shape[0]

    # ---- glue (plain JAX): reshape only; no batch padding, no W transpose ----
    x2d = x.reshape(b, num_inputs)
    out_dtype = jnp.result_type(x2d.dtype, weight.dtype)
    isz_x = x2d.dtype.itemsize
    isz_w = weight.dtype.itemsize
    isz_o = jnp.dtype(out_dtype).itemsize

    cap = _vmem_capacity_bytes()
    budget = 96 * _MIB if cap >= 100 * _MIB else 40 * _MIB
    budget = min(budget, cap - 16 * _MIB)
    row_align = 8 if isz_x >= 4 else (16 if isz_x == 2 else 32)

    # Lane-pad the head only when wide and not 128-aligned; tiny heads stay unpadded.
    if num_outputs % 128 == 0 or num_outputs < 96:
        n_p = num_outputs
    else:
        n_p = _round_up(num_outputs, 128)

    w_nk = weight                                   # [N, K]; trans-B done on the MXU
    b_row = bias.reshape(1, num_outputs)
    if n_p != num_outputs:
        w_nk = jnp.pad(w_nk, ((0, n_p - num_outputs), (0, 0)))
        b_row = jnp.pad(b_row, ((0, 0), (0, n_p - num_outputs)))

    w_bytes = n_p * num_inputs * isz_w
    k_tiled = w_bytes > cap // 8                    # resident W only while it is cheap

    if not k_tiled:
        # -------- resident-W path: grid over batch tiles only -------------------
        per_row = 2 * num_inputs * isz_x + 2 * n_p * isz_o     # x + y, double-buffered
        resident = 2 * (w_bytes + n_p * isz_w)                 # conservative (2x) W + bias
        tm = _pick_tm((budget - resident) // per_row, b, row_align, 2048)
        grid = (pl.cdiv(b, tm),)

        needed = tm * per_row + resident
        vmem_limit = int(min(cap, max(needed + 4 * _MIB, 32 * _MIB)))

        def run(resident_mode):
            return pl.pallas_call(
                _linear_kernel,
                out_shape=jax.ShapeDtypeStruct((b, n_p), out_dtype),
                grid_spec=pl.GridSpec(
                    grid=grid,
                    in_specs=[
                        pl.BlockSpec((tm, num_inputs), lambda i: (i, 0)),     # x streams
                        _resident_spec((n_p, num_inputs), lambda i: (0, 0),
                                       resident_mode),                        # W resident
                        _resident_spec((1, n_p), lambda i: (0, 0),
                                       resident_mode),                        # bias resident
                    ],
                    out_specs=pl.BlockSpec((tm, n_p), lambda i: (i, 0)),      # y streams
                ),
                compiler_params=pltpu.CompilerParams(
                    dimension_semantics=("parallel",),
                    vmem_limit_bytes=vmem_limit,
                ),
            )(x2d, w_nk, b_row)

        y = _run_maybe_single_buffered(run)
    else:
        # -------- large-K path: stream W, accumulate over a K grid axis ---------
        tk = min(2048, _round_up(num_inputs, 128))
        k_pad = _round_up(num_inputs, tk)           # zero-pad K only in this rare path
        x_p = x2d if k_pad == num_inputs else jnp.pad(x2d, ((0, 0), (0, k_pad - num_inputs)))
        w_p = w_nk if k_pad == num_inputs else jnp.pad(w_nk, ((0, 0), (0, k_pad - num_inputs)))

        w_tile = 2 * n_p * tk * isz_w + 2 * n_p * isz_w
        per_row = 2 * tk * isz_x + 2 * n_p * isz_o + 4 * n_p   # + f32 accumulator
        tm = _pick_tm((budget - w_tile) // per_row, b, row_align, 1024)
        grid = (pl.cdiv(b, tm), k_pad // tk)

        needed = tm * per_row + w_tile
        vmem_limit = int(min(cap, max(needed + 4 * _MIB, 32 * _MIB)))

        def run(resident_mode):
            return pl.pallas_call(
                _linear_kernel_ktiled,
                out_shape=jax.ShapeDtypeStruct((b, n_p), out_dtype),
                grid_spec=pltpu.PrefetchScalarGridSpec(
                    num_scalar_prefetch=0,
                    grid=grid,
                    in_specs=[
                        pl.BlockSpec((tm, tk), lambda i, k: (i, k)),          # x streams
                        pl.BlockSpec((n_p, tk), lambda i, k: (0, k)),         # W streams
                        _resident_spec((1, n_p), lambda i, k: (0, 0),
                                       resident_mode),                        # bias resident
                    ],
                    out_specs=pl.BlockSpec((tm, n_p), lambda i, k: (i, 0)),
                    scratch_shapes=[pltpu.VMEM((tm, n_p), jnp.float32)],
                ),
                compiler_params=pltpu.CompilerParams(
                    dimension_semantics=("parallel", "arbitrary"),
                    vmem_limit_bytes=vmem_limit,
                ),
            )(x_p, w_p, b_row)

        y = _run_maybe_single_buffered(run)

    # Slice only when the head was actually lane-padded.
    return y if n_p == num_outputs else y[:, :num_outputs]


if __name__ == "__main__":
    # Small shapes consistent with the module's forward:
    # x has a non-flat trailing shape (4 * 8 = 32 = num_inputs) to exercise the reshape.
    batch = 8
    num_inputs = 32
    num_outputs = 16

    key = jax.random.PRNGKey(0)
    kx, kw, kb = jax.random.split(key, 3)

    # Deterministic parameter init (mimics nn.Linear's U(-1/sqrt(in), 1/sqrt(in))).
    bound = 1.0 / jnp.sqrt(jnp.float32(num_inputs))
    weight = jax.random.uniform(
        kw, (num_outputs, num_inputs), jnp.float32, -bound, bound
    )  # PyTorch layout (out, in)
    bias = jax.random.uniform(kb, (num_outputs,), jnp.float32, -bound, bound)

    x = jax.random.normal(kx, (batch, 4, 8), jnp.float32)  # flattens to (8, 32)

    y = linear_regression_forward(x, weight, bias)
    y = jax.block_until_ready(y)
    y_ref = x.reshape(batch, num_inputs) @ weight.T + bias[None, :]
    assert y.shape == (batch, num_outputs)
    assert jnp.allclose(y, y_ref, atol=1e-5, rtol=1e-5)

    # Also exercise the un-padded ragged-batch path (boundary block, no jnp.pad).
    x2 = jax.random.normal(jax.random.PRNGKey(1), (11, 4, 8), jnp.float32)
    y2 = jax.block_until_ready(linear_regression_forward(x2, weight, bias))
    y2_ref = x2.reshape(11, num_inputs) @ weight.T + bias[None, :]
    assert y2.shape == (11, num_outputs)
    assert jnp.allclose(y2, y2_ref, atol=1e-5, rtol=1e-5)

    print("KERNEL_OK")
</pallas_src>

<mosaic_0001>
module attributes {stable_mosaic.version = 11 : i64} {
  func.func @_linear_kernel(%arg0: i32, %arg1: memref<8x32xf32, #tpu.memory_space<vmem>>, %arg2: memref<16x32xf32, #tpu.memory_space<vmem>>, %arg3: memref<1x16xf32, #tpu.memory_space<vmem>>, %arg4: memref<8x16xf32, #tpu.memory_space<vmem>>) attributes {dimension_semantics = [#tpu.dimension_semantics<parallel>], iteration_bounds = array<i64: 1>, scalar_prefetch = 0 : i64, scratch_operands = 0 : i64, tpu.core_type = #tpu.core_type<tc>, window_params = [{transform_indices = @transform_0, window_bounds = array<i64: 8, 32>}, {pipeline_mode = #tpu.pipeline_mode<synchronous>, transform_indices = @transform_1, window_bounds = array<i64: 16, 32>}, {pipeline_mode = #tpu.pipeline_mode<synchronous>, transform_indices = @transform_2, window_bounds = array<i64: 1, 16>}, {transform_indices = @transform_3, window_bounds = array<i64: 8, 16>}]} {
    %c0 = arith.constant 0 : index
    %c0_0 = arith.constant 0 : index
    %0 = vector.load %arg1[%c0, %c0_0] : memref<8x32xf32, #tpu.memory_space<vmem>>, vector<8x32xf32>
    %c0_1 = arith.constant 0 : index
    %c0_2 = arith.constant 0 : index
    %1 = vector.load %arg2[%c0_1, %c0_2] : memref<16x32xf32, #tpu.memory_space<vmem>>, vector<16x32xf32>
    %cst = arith.constant dense<0.000000e+00> : vector<8x16xf32>
    %2 = tpu.matmul %0, %1, %cst {dimension_numbers = #tpu.dot_dimension_numbers<[1], [1], [0], [0], [0, 0, 1, 0], [], []>} : vector<8x32xf32>, vector<16x32xf32>, vector<8x16xf32> -> vector<8x16xf32>
    %c0_3 = arith.constant 0 : index
    %c0_4 = arith.constant 0 : index
    %3 = vector.load %arg3[%c0_3, %c0_4] : memref<1x16xf32, #tpu.memory_space<vmem>>, vector<1x16xf32>
    %4 = vector.broadcast %3 : vector<1x16xf32> to vector<8x16xf32>
    %5 = arith.addf %2, %4 : vector<8x16xf32>
    %c0_5 = arith.constant 0 : index
    %c0_6 = arith.constant 0 : index
    %6 = vector.load %arg4[%c0_5, %c0_6] : memref<8x16xf32, #tpu.memory_space<vmem>>, vector<8x16xf32>
    tpu.vector_store %arg4[%c0_5, %c0_6], %5 {strides = array<i32>} : memref<8x16xf32, #tpu.memory_space<vmem>>, vector<8x16xf32>,
    return
  }
  func.func @transform_0(%arg0: i32) -> (i32, i32) {
    %c0_i32 = arith.constant 0 : i32
    %c0_i32_0 = arith.constant 0 : i32
    return %arg0, %c0_i32 : i32, i32
  }
  func.func @transform_1(%arg0: i32) -> (i32, i32) {
    %c0_i32 = arith.constant 0 : i32
    %c0_i32_0 = arith.constant 0 : i32
    %c0_i32_1 = arith.constant 0 : i32
    return %c0_i32, %c0_i32_0 : i32, i32
  }
  func.func @transform_2(%arg0: i32) -> (i32, i32) {
    %c0_i32 = arith.constant 0 : i32
    %c0_i32_0 = arith.constant 0 : i32
    %c0_i32_1 = arith.constant 0 : i32
    return %c0_i32, %c0_i32_0 : i32, i32
  }
  func.func @transform_3(%arg0: i32) -> (i32, i32) {
    %c0_i32 = arith.constant 0 : i32
    %c0_i32_0 = arith.constant 0 : i32
    return %arg0, %c0_i32 : i32, i32
  }
}

module attributes {stable_mosaic.version = 11 : i64} {
  func.func @_linear_kernel(%arg0: i32, %arg1: memref<8x32xf32, #tpu.memory_space<vmem>>, %arg2: memref<16x32xf32, #tpu.memory_space<vmem>>, %arg3: memref<1x16xf32, #tpu.memory_space<vmem>>, %arg4: memref<8x16xf32, #tpu.memory_space<vmem>>) attributes {dimension_semantics = [#tpu.dimension_semantics<parallel>], iteration_bounds = array<i64: 1>, scalar_prefetch = 0 : i64, scratch_operands = 0 : i64, tpu.core_type = #tpu.core_type<tc>, window_params = [{transform_indices = @transform_0, window_bounds = array<i64: 8, 32>}, {pipeline_mode = #tpu.pipeline_mode<synchronous>, transform_indices = @transform_1, window_bounds = array<i64: 16, 32>}, {pipeline_mode = #tpu.pipeline_mode<synchronous>, transform_indices = @transform_2, window_bounds = array<i64: 1, 16>}, {transform_indices = @transform_3, window_bounds = array<i64: 8, 16>}]} {
    %c0 = arith.constant 0 : index
    %c0_0 = arith.constant 0 : index
    %0 = vector.load %arg1[%c0, %c0_0] : memref<8x32xf32, #tpu.memory_space<vmem>>, vector<8x32xf32>
    %c0_1 = arith.constant 0 : index
    %c0_2 = arith.constant 0 : index
    %1 = vector.load %arg2[%c0_1, %c0_2] : memref<16x32xf32, #tpu.memory_space<vmem>>, vector<16x32xf32>
    %cst = arith.constant dense<0.000000e+00> : vector<8x16xf32>
    %2 = tpu.matmul %0, %1, %cst {dimension_numbers = #tpu.dot_dimension_numbers<[1], [1], [0], [0], [0, 0, 1, 0], [], []>} : vector<8x32xf32>, vector<16x32xf32>, vector<8x16xf32> -> vector<8x16xf32>
    %c0_3 = arith.constant 0 : index
    %c0_4 = arith.constant 0 : index
    %3 = vector.load %arg3[%c0_3, %c0_4] : memref<1x16xf32, #tpu.memory_space<vmem>>, vector<1x16xf32>
    %4 = vector.broadcast %3 : vector<1x16xf32> to vector<8x16xf32>
    %5 = arith.addf %2, %4 : vector<8x16xf32>
    %c0_5 = arith.constant 0 : index
    %c0_6 = arith.constant 0 : index
    %6 = vector.load %arg4[%c0_5, %c0_6] : memref<8x16xf32, #tpu.memory_space<vmem>>, vector<8x16xf32>
    tpu.vector_store %arg4[%c0_5, %c0_6], %5 {strides = array<i32>} : memref<8x16xf32, #tpu.memory_space<vmem>>, vector<8x16xf32>,
    return
  }
  func.func @transform_0(%arg0: i32) -> (i32, i32) {
    %c0_i32 = arith.constant 0 : i32
    %c0_i32_0 = arith.constant 0 : i32
    return %arg0, %c0_i32 : i32, i32
  }
  func.func @transform_1(%arg0: i32) -> (i32, i32) {
    %c0_i32 = arith.constant 0 : i32
    %c0_i32_0 = arith.constant 0 : i32
    %c0_i32_1 = arith.constant 0 : i32
    return %c0_i32, %c0_i32_0 : i32, i32
  }
  func.func @transform_2(%arg0: i32) -> (i32, i32) {
    %c0_i32 = arith.constant 0 : i32
    %c0_i32_0 = arith.constant 0 : i32
    %c0_i32_1 = arith.constant 0 : i32
    return %c0_i32, %c0_i32_0 : i32, i32
  }
  func.func @transform_3(%arg0: i32) -> (i32, i32) {
    %c0_i32 = arith.constant 0 : i32
    %c0_i32_0 = arith.constant 0 : i32
    return %arg0, %c0_i32 : i32, i32
  }
}

</mosaic_0001>

<llo_original>
// kernel: tpu_custom_call.1
$region0: #{tpu_custom_call.1}
  #allocation0 [shape = 'u32[]', space=smem, size = 0x4, offset = 0x4, fixed_abs, tag = 'smem constant byte address 0x4 - core index']
  #allocation1 [shape = 'u32[72,128]{1,0:T(1,128)}', space=vmem, size = 0x9000, scoped, tag = 'internal scratch']
  %s0 = inlined_call_operand.hbm [shape: f32[8,32], index: 0, kind: input, shape index: {}]
  %s1 = inlined_call_operand.hbm [shape: f32[16,32], index: 1, kind: input, shape index: {}]
  %s2 = inlined_call_operand.vmem [shape: f32[1,16], index: 2, kind: input, shape index: {}]
  %s3 = inlined_call_operand.hbm [shape: f32[8,16], index: 3, kind: output, shape index: {}]
  %s4 = sld [smem:[#allocation0]]
  $region30: #{tpu_custom_call.1} parent=0
    _
  %s6 = ssub.s32 1, %s4
  %s7 = scalar_select 0, %s6, %s4
  $region1: #{tpu_custom_call.1} parent=0
    #allocation2 [shape = 'u8[4096]{0}', space=vmem, size = 0x1000, scoped, tag = 'input window, operand 0, single buffered']
    #allocation3 [shape = 's32[1]{0}', space=sflag, size = 0x4, scoped, tag = 'scoped memory for tpu_custom_call.1']
    #allocation4 [shape = 's32[1]{0}', space=sflag, size = 0x4, scoped, tag = 'scoped memory for tpu_custom_call.1']
    #allocation5 [shape = 'u8[8192]{0}', space=vmem, size = 0x2000, scoped, tag = 'input window, operand 1, single buffered']
    #allocation6 [shape = 's32[1]{0}', space=sflag, size = 0x4, scoped, tag = 'scoped memory for tpu_custom_call.1']
    #allocation7 [shape = 'u8[4096]{0}', space=vmem, size = 0x1000, scoped, tag = 'output window, operand 0, single buffered']
    %8 = vsyncpa [#allocation3], 0
    %9 = vsyncpa [#allocation6], 0
    %10 = vsyncpa [#allocation4], 0
    // Predicated region
    $region2: #{tpu_custom_call.1} parent=1 // pred_check
      _
    $region3: #{tpu_custom_call.1} parent=1 // pred_check_branch
      %12 = sbr.rel (0) target = $region5
    $region4: #{tpu_custom_call.1} parent=1 // pred_region
      %14 = vsyncadd [#allocation3], 0
      %s16 = sshll.u32 %s0, 4
      %s17 = int_to_ptr.hbm [resolvable:$true] %s16
      %s18 = sshll.u32 [#allocation2], 4
      %s19 = int_to_ptr.vmem [resolvable:$true] %s18
      %21 = dma.hbm_to_vmem [thread:$0]  %s17, 128, %s19, [#allocation3]
    $region5: #{tpu_custom_call.1} parent=1 // pred_fallthru
      _
    // Predicated region
    $region6: #{tpu_custom_call.1} parent=1 // pred_check
      _
    $region7: #{tpu_custom_call.1} parent=1 // pred_check_branch
      %23 = sbr.rel (0) target = $region9
    $region8: #{tpu_custom_call.1} parent=1 // pred_region
      %25 = vsyncadd [#allocation6], 0
      %s26 = sshll.u32 %s1, 4
      %s27 = int_to_ptr.hbm [resolvable:$true] %s26
      %s28 = sshll.u32 [#allocation5], 4
      %s29 = int_to_ptr.vmem [resolvable:$true] %s28
      %34 = dma.hbm_to_vmem [thread:$0]  %s27, 256, %s29, [#allocation6], 128, 128, 8
    $region9: #{tpu_custom_call.1} parent=1 // pred_fallthru
      _
    // Predicated region
    $region10: #{tpu_custom_call.1} parent=1 // pred_check
      _
    $region11: #{tpu_custom_call.1} parent=1 // pred_check_branch
      %36 = sbr.rel (0) target = $region13
    $region12: #{tpu_custom_call.1} parent=1 // pred_region
      _
    $region13: #{tpu_custom_call.1} parent=1 // pred_fallthru
      _
    // Predicated region
    $region14: #{tpu_custom_call.1} parent=1 // pred_check
      _
    $region15: #{tpu_custom_call.1} parent=1 // pred_check_branch
      %38 = sbr.rel (0) target = $region17
    $region16: #{tpu_custom_call.1} parent=1 // pred_region
      %40 = dma.done [#allocation3], 128
    $region17: #{tpu_custom_call.1} parent=1 // pred_fallthru
      _
    // Predicated region
    $region18: #{tpu_custom_call.1} parent=1 // pred_check
      _
    $region19: #{tpu_custom_call.1} parent=1 // pred_check_branch
      %42 = sbr.rel (0) target = $region21
    $region20: #{tpu_custom_call.1} parent=1 // pred_region
      %44 = dma.done [#allocation6], 256
    $region21: #{tpu_custom_call.1} parent=1 // pred_fallthru
      _
    %v45 = vld [vmem:[#allocation2] sm:$0xff]
    %v46 = vld [vmem:[#allocation5] sm:$0xff]
    %v47 = vld [vmem:[#allocation5 + $0x8] sm:$0xff]
    %v48 = vld [vmem:[%s2] sm:$0x1]
    %v50 = vperm.slane %v48, 0
    %vm52 = vcmask 261120
    %v54 = vsel %vm52, %v45, 0
    %v57 = vsel %vm52, %v46, 0
    %v60 = vsel %vm52, %v47, 0
    %62 = vmatpush.xpose.msra.mxu0 0.0
    %63 = vmatpush.xpose.msra.mxu0 0.0
    %64 = vmatpush.xpose.msra.mxu0 0.0
    %65 = vmatpush.xpose.msra.mxu0 0.0
    %66 = vmatpush.xpose.msra.mxu0 0.0
    %67 = vmatpush.xpose.msra.mxu0 0.0
    %68 = vmatpush.xpose.msra.mxu0 0.0
    %69 = vmatpush.xpose.msra.mxu0 0.0
    %70 = vmatpush.xpose.msra.mxu0 0.0
    %71 = vmatpush.xpose.msra.mxu0 0.0
    %72 = vmatpush.xpose.msra.mxu0 0.0
    %73 = vmatpush.xpose.msra.mxu0 0.0
    %74 = vmatpush.xpose.msra.mxu0 0.0
    %75 = vmatpush.xpose.msra.mxu0 0.0
    %76 = vmatpush.xpose.msra.mxu0 %v60
    %77 = vmatpush.xpose.msra.mxu0 %v57
    %78 = vmatmul.f32.gmra.mxu0 %v54
    %v79 = vpop.f32.mrf.mxu0
    %v80 = vadd.f32 %v50, %v79
    %81 = vdwg.mxu0
    %vm82 = vcmask 130048
    %83 = vst.msk [vmem:[#allocation7] sm:$0xff] %vm82, %v80
    // Predicated region
    $region22: #{tpu_custom_call.1} parent=1 // pred_check
      _
    $region23: #{tpu_custom_call.1} parent=1 // pred_check_branch
      %85 = sbr.rel (0) target = $region25
    $region24: #{tpu_custom_call.1} parent=1 // pred_region
      %87 = vsyncadd [#allocation4], 0
      %s89 = sshll.u32 [#allocation7], 4
      %s90 = int_to_ptr.vmem [resolvable:$true] %s89
      %s91 = sshll.u32 %s3, 4
      %s92 = int_to_ptr.hbm [resolvable:$true] %s91
      %94 = dma.vmem_to_hbm [thread:$0]  %s90, 128, %s92, [#allocation4]
    $region25: #{tpu_custom_call.1} parent=1 // pred_fallthru
      _
    // Predicated region
    $region26: #{tpu_custom_call.1} parent=1 // pred_check
      _
    $region27: #{tpu_custom_call.1} parent=1 // pred_check_branch
      %96 = sbr.rel (0) target = $region29
    $region28: #{tpu_custom_call.1} parent=1 // pred_region
      %98 = dma.done [#allocation4], 128
    $region29: #{tpu_custom_call.1} parent=1 // pred_fallthru
      _
    %99 = vsyncpa [#allocation3], 1
    %100 = vsyncpa [#allocation6], 1
    %101 = vsyncpa [#allocation4], 1

// kernel: tpu_custom_call.1
$region0: #{tpu_custom_call.1}
  #allocation0 [shape = 'u32[]', space=smem, size = 0x4, offset = 0x4, fixed_abs, tag = 'smem constant byte address 0x4 - core index']
  #allocation1 [shape = 'u32[72,128]{1,0:T(1,128)}', space=vmem, size = 0x9000, scoped, tag = 'internal scratch']
  %s0 = inlined_call_operand.hbm [shape: f32[8,32], index: 0, kind: input, shape index: {}]
  %s1 = inlined_call_operand.hbm [shape: f32[16,32], index: 1, kind: input, shape index: {}]
  %s2 = inlined_call_operand.vmem [shape: f32[1,16], index: 2, kind: input, shape index: {}]
  %s3 = inlined_call_operand.hbm [shape: f32[8,16], index: 3, kind: output, shape index: {}]
  %s4 = sld [smem:[#allocation0]]
  $region30: #{tpu_custom_call.1} parent=0
    _
  %s6 = ssub.s32 1, %s4
  %s7 = scalar_select 0, %s6, %s4
  $region1: #{tpu_custom_call.1} parent=0
    #allocation2 [shape = 'u8[4096]{0}', space=vmem, size = 0x1000, scoped, tag = 'input window, operand 0, single buffered']
    #allocation3 [shape = 's32[1]{0}', space=sflag, size = 0x4, scoped, tag = 'scoped memory for tpu_custom_call.1']
    #allocation4 [shape = 's32[1]{0}', space=sflag, size = 0x4, scoped, tag = 'scoped memory for tpu_custom_call.1']
    #allocation5 [shape = 'u8[8192]{0}', space=vmem, size = 0x2000, scoped, tag = 'input window, operand 1, single buffered']
    #allocation6 [shape = 's32[1]{0}', space=sflag, size = 0x4, scoped, tag = 'scoped memory for tpu_custom_call.1']
    #allocation7 [shape = 'u8[4096]{0}', space=vmem, size = 0x1000, scoped, tag = 'output window, operand 0, single buffered']
    %8 = vsyncpa [#allocation3], 0
    %9 = vsyncpa [#allocation6], 0
    %10 = vsyncpa [#allocation4], 0
    // Predicated region
    $region2: #{tpu_custom_call.1} parent=1 // pred_check
      _
    $region3: #{tpu_custom_call.1} parent=1 // pred_check_branch
      %12 = sbr.rel (0) target = $region5
    $region4: #{tpu_custom_call.1} parent=1 // pred_region
      %14 = vsyncadd [#allocation3], 0
      %s16 = sshll.u32 %s0, 4
      %s17 = int_to_ptr.hbm [resolvable:$true] %s16
      %s18 = sshll.u32 [#allocation2], 4
      %s19 = int_to_ptr.vmem [resolvable:$true] %s18
      %21 = dma.hbm_to_vmem [thread:$0]  %s17, 128, %s19, [#allocation3]
    $region5: #{tpu_custom_call.1} parent=1 // pred_fallthru
      _
    // Predicated region
    $region6: #{tpu_custom_call.1} parent=1 // pred_check
      _
    $region7: #{tpu_custom_call.1} parent=1 // pred_check_branch
      %23 = sbr.rel (0) target = $region9
    $region8: #{tpu_custom_call.1} parent=1 // pred_region
      %25 = vsyncadd [#allocation6], 0
      %s26 = sshll.u32 %s1, 4
      %s27 = int_to_ptr.hbm [resolvable:$true] %s26
      %s28 = sshll.u32 [#allocation5], 4
      %s29 = int_to_ptr.vmem [resolvable:$true] %s28
      %34 = dma.hbm_to_vmem [thread:$0]  %s27, 256, %s29, [#allocation6], 128, 128, 8
    $region9: #{tpu_custom_call.1} parent=1 // pred_fallthru
      _
    // Predicated region
    $region10: #{tpu_custom_call.1} parent=1 // pred_check
      _
    $region11: #{tpu_custom_call.1} parent=1 // pred_check_branch
      %36 = sbr.rel (0) target = $region13
    $region12: #{tpu_custom_call.1} parent=1 // pred_region
      _
    $region13: #{tpu_custom_call.1} parent=1 // pred_fallthru
      _
    // Predicated region
    $region14: #{tpu_custom_call.1} parent=1 // pred_check
      _
    $region15: #{tpu_custom_call.1} parent=1 // pred_check_branch
      %38 = sbr.rel (0) target = $region17
    $region16: #{tpu_custom_call.1} parent=1 // pred_region
      %40 = dma.done [#allocation3], 128
    $region17: #{tpu_custom_call.1} parent=1 // pred_fallthru
      _
    // Predicated region
    $region18: #{tpu_custom_call.1} parent=1 // pred_check
      _
    $region19: #{tpu_custom_call.1} parent=1 // pred_check_branch
      %42 = sbr.rel (0) target = $region21
    $region20: #{tpu_custom_call.1} parent=1 // pred_region
      %44 = dma.done [#allocation6], 256
    $region21: #{tpu_custom_call.1} parent=1 // pred_fallthru
      _
    %v45 = vld [vmem:[#allocation2] sm:$0xff]
    %v46 = vld [vmem:[#allocation5] sm:$0xff]
    %v47 = vld [vmem:[#allocation5 + $0x8] sm:$0xff]
    %v48 = vld [vmem:[%s2] sm:$0x1]
    %v50 = vperm.slane %v48, 0
    %vm52 = vcmask 261120
    %v54 = vsel %vm52, %v45, 0
    %v57 = vsel %vm52, %v46, 0
    %v60 = vsel %vm52, %v47, 0
    %62 = vmatpush.xpose.msra.mxu0 0.0
    %63 = vmatpush.xpose.msra.mxu0 0.0
    %64 = vmatpush.xpose.msra.mxu0 0.0
    %65 = vmatpush.xpose.msra.mxu0 0.0
    %66 = vmatpush.xpose.msra.mxu0 0.0
    %67 = vmatpush.xpose.msra.mxu0 0.0
    %68 = vmatpush.xpose.msra.mxu0 0.0
    %69 = vmatpush.xpose.msra.mxu0 0.0
    %70 = vmatpush.xpose.msra.mxu0 0.0
    %71 = vmatpush.xpose.msra.mxu0 0.0
    %72 = vmatpush.xpose.msra.mxu0 0.0
    %73 = vmatpush.xpose.msra.mxu0 0.0
    %74 = vmatpush.xpose.msra.mxu0 0.0
    %75 = vmatpush.xpose.msra.mxu0 0.0
    %76 = vmatpush.xpose.msra.mxu0 %v60
    %77 = vmatpush.xpose.msra.mxu0 %v57
    %78 = vmatmul.f32.gmra.mxu0 %v54
    %v79 = vpop.f32.mrf.mxu0
    %v80 = vadd.f32 %v50, %v79
    %81 = vdwg.mxu0
    %vm82 = vcmask 130048
    %83 = vst.msk [vmem:[#allocation7] sm:$0xff] %vm82, %v80
    // Predicated region
    $region22: #{tpu_custom_call.1} parent=1 // pred_check
      _
    $region23: #{tpu_custom_call.1} parent=1 // pred_check_branch
      %85 = sbr.rel (0) target = $region25
    $region24: #{tpu_custom_call.1} parent=1 // pred_region
      %87 = vsyncadd [#allocation4], 0
      %s89 = sshll.u32 [#allocation7], 4
      %s90 = int_to_ptr.vmem [resolvable:$true] %s89
      %s91 = sshll.u32 %s3, 4
      %s92 = int_to_ptr.hbm [resolvable:$true] %s91
      %94 = dma.vmem_to_hbm [thread:$0]  %s90, 128, %s92, [#allocation4]
    $region25: #{tpu_custom_call.1} parent=1 // pred_fallthru
      _
    // Predicated region
    $region26: #{tpu_custom_call.1} parent=1 // pred_check
      _
    $region27: #{tpu_custom_call.1} parent=1 // pred_check_branch
      %96 = sbr.rel (0) target = $region29
    $region28: #{tpu_custom_call.1} parent=1 // pred_region
      %98 = dma.done [#allocation4], 128
    $region29: #{tpu_custom_call.1} parent=1 // pred_fallthru
      _
    %99 = vsyncpa [#allocation3], 1
    %100 = vsyncpa [#allocation6], 1
    %101 = vsyncpa [#allocation4], 1

</llo_original>
